<compile_context>
chip_gen: v6e
topology: v6e:2x2x1
jax: 0.10.0
libtpu: 0.0.40
codegen_flags: <defaults>
</compile_context>

<pallas_src>
import jax
import jax.numpy as jnp
from jax.experimental import pallas as pl
from jax.experimental.pallas import tpu as pltpu


def _round_up(x: int, m: int) -> int:
    return (x + m - 1) // m * m


def _cdiv(a: int, b: int) -> int:
    return (a + b - 1) // b


def _linear_bias_kernel(x_ref, w_ref, b_ref, o_ref, acc_ref):
    # Grid: (m_tiles, n_tiles, k_tiles). K is the reduction axis (last, "arbitrary").
    # x_ref: (TM, TK)  w_ref: (TK, TN)  b_ref: (1, TN) f32
    # o_ref: (TM, TN)  acc_ref: VMEM (TM, TN) f32
    k = pl.program_id(2)

    @pl.when(k == 0)
    def _init():
        # Fold the bias into the accumulator init -> no extra epilogue VPU pass.
        acc_ref[...] = jnp.broadcast_to(b_ref[...], acc_ref.shape)

    acc_ref[...] += jnp.dot(
        x_ref[...], w_ref[...], preferred_element_type=jnp.float32
    )

    @pl.when(k == pl.num_programs(2) - 1)
    def _finalize():
        o_ref[...] = acc_ref[...].astype(o_ref.dtype)


def module_forward(x, weight, bias, *, tile_m=512, min_pallas_rows=64,
                   compute_dtype=None, exact=False,
                   vmem_budget_bytes=40 * 1024 * 1024):
    """Concrete Module.forward(): y = x @ W + b.

    x:      (B, S, input_size)
    weight: (input_size, output_size)
    bias:   (output_size,)
    returns (B, S, output_size), dtype == x.dtype
    """
    B, S, D_in = x.shape
    assert weight.shape[0] == D_in
    D_out = weight.shape[1]
    assert bias.shape == (D_out,)
    M = B * S
    out_dtype = x.dtype
    out_bytes = jnp.dtype(out_dtype).itemsize

    # --- MXU operand dtype: bf16 by default for f32 inputs (f32 accumulation) ---
    if compute_dtype is None:
        compute_dtype = x.dtype if (exact or x.dtype != jnp.float32) else jnp.bfloat16
    compute_dtype = jnp.dtype(compute_dtype)
    in_bytes = compute_dtype.itemsize
    sublane_mult = {4: 8, 2: 16, 1: 32}.get(in_bytes, 8)

    x2d = x.reshape(M, D_in)

    # Tiny problems: per-grid-step overhead dominates; defer to XLA's fused GEMM
    # (same operand dtype / f32 accumulation as the Pallas path).
    if M < min_pallas_rows:
        y = jnp.dot(x2d.astype(compute_dtype), weight.astype(compute_dtype),
                    preferred_element_type=jnp.float32)
        y = (y + bias.astype(jnp.float32)).astype(out_dtype)
        return y.reshape(B, S, D_out)

    # TODO(synk): when weights are static across calls, hoist the cast / pad of
    #             (weight, bias) to parameter setup to avoid per-call HBM traffic.
    x2d = x2d.astype(compute_dtype)
    weight = weight.astype(compute_dtype)
    bias_f32 = bias.astype(jnp.float32)

    # --- N (output) handling: avoid padding / post-kernel slice when possible ---
    if D_out % 128 == 0:
        D_out_pad, pad_n = D_out, False
    elif D_out <= 512:
        # Small output: write it unpadded (masked stores) instead of paying an
        # extra HBM read+write for a post-kernel slice of a padded buffer.
        D_out_pad, pad_n = D_out, False
    else:
        D_out_pad, pad_n = _round_up(D_out, 128), True
        weight = jnp.pad(weight, ((0, 0), (0, D_out_pad - D_out)))
        bias_f32 = jnp.pad(bias_f32, (0, D_out_pad - D_out))
    b2d = bias_f32.reshape(1, D_out_pad)

    # --- K (reduction) handling -------------------------------------------------
    D_in_pad = D_in
    w_resident_bytes = D_in * D_out_pad * in_bytes
    x_block_bytes_full_k = tile_m * D_in * in_bytes
    if (w_resident_bytes <= 8 * 1024 * 1024
            and x_block_bytes_full_k <= 12 * 1024 * 1024):
        # Single K tile: W stays resident in VMEM, constant index along m lets
        # the pipeline skip re-fetching it from HBM.
        tile_k = D_in
    else:
        tile_k = None
        for cand in (512, 384, 256, 128):
            if cand <= D_in and D_in % cand == 0:
                tile_k = cand
                break
        if tile_k is None:
            # Large D_in that is not a multiple of 128: pad K (zero rows of W
            # contribute nothing).  TODO(synk): replace with a masked last K
            # tile to avoid the extra activation pad copy in HBM.
            D_in_pad = _round_up(D_in, 128)
            x2d = jnp.pad(x2d, ((0, 0), (0, D_in_pad - D_in)))
            weight = jnp.pad(weight, ((0, D_in_pad - D_in), (0, 0)))
            for cand in (512, 384, 256, 128):
                if D_in_pad % cand == 0:
                    tile_k = cand
                    break

    # --- tile_m / tile_n selection under the VMEM budget -------------------------
    n_cap = 2048 if in_bytes <= 2 else 1024
    tile_n = min(D_out_pad, n_cap)
    tile_m = min(tile_m, _round_up(M, sublane_mult))
    tile_m = max(tile_m, sublane_mult)

    def vmem_bytes(tm, tn, tk):
        return (2 * tm * tk * in_bytes      # x blocks (double-buffered)
                + 2 * tk * tn * in_bytes    # w blocks
                + 2 * 1 * tn * 4            # bias blocks
                + 2 * tm * tn * out_bytes   # out blocks
                + tm * tn * 4)              # f32 accumulator scratch

    # Shrink N first (keeps tile_m large for HBM roofline), then M.
    while (vmem_bytes(tile_m, tile_n, tile_k) > vmem_budget_bytes
           and tile_n % 256 == 0 and tile_n > 128):
        tile_n //= 2
    while (vmem_bytes(tile_m, tile_n, tile_k) > vmem_budget_bytes
           and tile_m > sublane_mult):
        tile_m = max(sublane_mult, _round_up(tile_m // 2, sublane_mult))

    g_m = _cdiv(M, tile_m)
    g_n = _cdiv(D_out_pad, tile_n)
    # Make sure both TensorCores (v7x) get work from the parallel axes.
    if g_m * g_n == 1 and M >= 2 * sublane_mult:
        tile_m = _round_up(_cdiv(M, 2), sublane_mult)
        g_m = _cdiv(M, tile_m)
    g_k = D_in_pad // tile_k
    grid = (g_m, g_n, g_k)

    vmem_limit = min(56 * 1024 * 1024,
                     max(32 * 1024 * 1024,
                         int(1.3 * vmem_bytes(tile_m, tile_n, tile_k))
                         + 2 * 1024 * 1024))

    # Honest cost hint: W is re-streamed once per m tile when K or N is tiled.
    w_rereads = g_m if (g_k > 1 or g_n > 1) else 1
    cost = pl.CostEstimate(
        flops=2 * M * D_in_pad * D_out_pad,
        transcendentals=0,
        bytes_accessed=(
            M * D_in_pad * in_bytes
            + w_rereads * D_in_pad * D_out_pad * in_bytes
            + D_out_pad * 4
            + M * D_out_pad * out_bytes
        ),
    )

    out2d = pl.pallas_call(
        _linear_bias_kernel,
        out_shape=jax.ShapeDtypeStruct((M, D_out_pad), out_dtype),
        grid=grid,
        in_specs=[
            pl.BlockSpec((tile_m, tile_k), lambda m, n, k: (m, k)),
            pl.BlockSpec((tile_k, tile_n), lambda m, n, k: (k, n)),
            pl.BlockSpec((1, tile_n), lambda m, n, k: (0, n)),
        ],
        out_specs=pl.BlockSpec((tile_m, tile_n), lambda m, n, k: (m, n)),
        scratch_shapes=[pltpu.VMEM((tile_m, tile_n), jnp.float32)],
        compiler_params=pltpu.CompilerParams(
            dimension_semantics=("parallel", "parallel", "arbitrary"),
            vmem_limit_bytes=vmem_limit,
        ),
        cost_estimate=cost,
    )(x2d, weight, b2d)

    if pad_n:
        out2d = out2d[:, :D_out]
    return out2d.reshape(B, S, D_out)


if __name__ == "__main__":
    # Module contract: input_size / output_size (last-dim socket & plug).
    batch, seq = 2, 512
    input_size, output_size = 32, 64

    key = jax.random.PRNGKey(0)
    kx, kw, kb = jax.random.split(key, 3)

    x = jax.random.normal(kx, (batch, seq, input_size), dtype=jnp.float32)
    # Deterministic synthetic parameter init (no checkpoint load).
    weight = jax.random.normal(kw, (input_size, output_size), dtype=jnp.float32) * 0.02
    bias = jax.random.normal(kb, (output_size,), dtype=jnp.float32) * 0.01

    ref = jnp.einsum("bsi,io->bso", x, weight,
                     precision=jax.lax.Precision.HIGHEST) + bias

    # Default path: bf16 MXU operands, f32 accumulation.
    y = jax.block_until_ready(module_forward(x, weight, bias))
    assert y.shape == (batch, seq, output_size)
    assert y.dtype == x.dtype
    assert jnp.allclose(y, ref, atol=1e-2, rtol=1e-2)

    # Exact path: f32 operands end-to-end.
    y_exact = jax.block_until_ready(module_forward(x, weight, bias, exact=True))
    assert jnp.allclose(y_exact, ref, atol=1e-4, rtol=1e-4)

    print("KERNEL_OK")
</pallas_src>

<mosaic_0001>
module attributes {stable_mosaic.version = 11 : i64} {
  func.func @_linear_bias_kernel(%arg0: i32, %arg1: i32, %arg2: i32, %arg3: memref<512x32xbf16, #tpu.memory_space<vmem>>, %arg4: memref<32x64xbf16, #tpu.memory_space<vmem>>, %arg5: memref<1x64xf32, #tpu.memory_space<vmem>>, %arg6: memref<512x64xf32, #tpu.memory_space<vmem>>, %arg7: memref<512x64xf32, #tpu.memory_space<vmem>>) attributes {dimension_semantics = [#tpu.dimension_semantics<parallel>, #tpu.dimension_semantics<parallel>, #tpu.dimension_semantics<arbitrary>], iteration_bounds = array<i64: 2, 1, 1>, scalar_prefetch = 0 : i64, scratch_operands = 1 : i64, tpu.core_type = #tpu.core_type<tc>, window_params = [{transform_indices = @transform_0, window_bounds = array<i64: 512, 32>}, {transform_indices = @transform_1, window_bounds = array<i64: 32, 64>}, {transform_indices = @transform_2, window_bounds = array<i64: 1, 64>}, {transform_indices = @transform_3, window_bounds = array<i64: 512, 64>}]} {
    %c0_i32 = arith.constant 0 : i32
    %0 = arith.cmpi eq, %arg2, %c0_i32 : i32
    %1 = arith.extui %0 : i1 to i32
    %c0_i32_0 = arith.constant 0 : i32
    %2 = arith.cmpi ne, %1, %c0_i32_0 : i32
    scf.if %2 {
      %c0_10 = arith.constant 0 : index
      %c0_11 = arith.constant 0 : index
      %12 = vector.load %arg5[%c0_10, %c0_11] : memref<1x64xf32, #tpu.memory_space<vmem>>, vector<1x64xf32>
      %13 = vector.shape_cast %12 : vector<1x64xf32> to vector<1x64xf32>
      %14 = vector.broadcast %13 : vector<1x64xf32> to vector<512x64xf32>
      %c0_12 = arith.constant 0 : index
      %c0_13 = arith.constant 0 : index
      %15 = vector.load %arg7[%c0_12, %c0_13] : memref<512x64xf32, #tpu.memory_space<vmem>>, vector<512x64xf32>
      tpu.vector_store %arg7[%c0_12, %c0_13], %14 {strides = array<i32>} : memref<512x64xf32, #tpu.memory_space<vmem>>, vector<512x64xf32>,
    } else {
    }
    %c0 = arith.constant 0 : index
    %c0_1 = arith.constant 0 : index
    %3 = vector.load %arg7[%c0, %c0_1] : memref<512x64xf32, #tpu.memory_space<vmem>>, vector<512x64xf32>
    %c0_2 = arith.constant 0 : index
    %c0_3 = arith.constant 0 : index
    %4 = vector.load %arg3[%c0_2, %c0_3] : memref<512x32xbf16, #tpu.memory_space<vmem>>, vector<512x32xbf16>
    %c0_4 = arith.constant 0 : index
    %c0_5 = arith.constant 0 : index
    %5 = vector.load %arg4[%c0_4, %c0_5] : memref<32x64xbf16, #tpu.memory_space<vmem>>, vector<32x64xbf16>
    %cst = arith.constant dense<0.000000e+00> : vector<512x64xf32>
    %6 = tpu.matmul %4, %5, %cst {dimension_numbers = #tpu.dot_dimension_numbers<[1], [0], [0], [1], [0, 0, 1, 1], [], []>} : vector<512x32xbf16>, vector<32x64xbf16>, vector<512x64xf32> -> vector<512x64xf32>
    %7 = arith.addf %3, %6 : vector<512x64xf32>
    %c0_6 = arith.constant 0 : index
    %c0_7 = arith.constant 0 : index
    %8 = vector.load %arg7[%c0_6, %c0_7] : memref<512x64xf32, #tpu.memory_space<vmem>>, vector<512x64xf32>
    tpu.vector_store %arg7[%c0_6, %c0_7], %7 {strides = array<i32>} : memref<512x64xf32, #tpu.memory_space<vmem>>, vector<512x64xf32>,
    %c0_i32_8 = arith.constant 0 : i32
    %9 = arith.cmpi eq, %arg2, %c0_i32_8 : i32
    %10 = arith.extui %9 : i1 to i32
    %c0_i32_9 = arith.constant 0 : i32
    %11 = arith.cmpi ne, %10, %c0_i32_9 : i32
    scf.if %11 {
      %c0_10 = arith.constant 0 : index
      %c0_11 = arith.constant 0 : index
      %12 = vector.load %arg7[%c0_10, %c0_11] : memref<512x64xf32, #tpu.memory_space<vmem>>, vector<512x64xf32>
      %c0_12 = arith.constant 0 : index
      %c0_13 = arith.constant 0 : index
      %13 = vector.load %arg6[%c0_12, %c0_13] : memref<512x64xf32, #tpu.memory_space<vmem>>, vector<512x64xf32>
      tpu.vector_store %arg6[%c0_12, %c0_13], %12 {strides = array<i32>} : memref<512x64xf32, #tpu.memory_space<vmem>>, vector<512x64xf32>,
    } else {
    }
    return
  }
  func.func @transform_0(%arg0: i32, %arg1: i32, %arg2: i32) -> (i32, i32) {
    %c0_i32 = arith.constant 0 : i32
    return %arg0, %arg2 : i32, i32
  }
  func.func @transform_1(%arg0: i32, %arg1: i32, %arg2: i32) -> (i32, i32) {
    %c0_i32 = arith.constant 0 : i32
    return %arg2, %arg1 : i32, i32
  }
  func.func @transform_2(%arg0: i32, %arg1: i32, %arg2: i32) -> (i32, i32) {
    %c0_i32 = arith.constant 0 : i32
    %c0_i32_0 = arith.constant 0 : i32
    return %c0_i32, %arg1 : i32, i32
  }
  func.func @transform_3(%arg0: i32, %arg1: i32, %arg2: i32) -> (i32, i32) {
    %c0_i32 = arith.constant 0 : i32
    return %arg0, %arg1 : i32, i32
  }
}

</mosaic_0001>

<llo_original>
// kernel: tpu_custom_call.1
$region0: #{tpu_custom_call.1}
  #allocation0 [shape = 'u32[]', space=smem, size = 0x4, offset = 0x4, fixed_abs, tag = 'smem constant byte address 0x4 - core index']
  #allocation1 [shape = 'u32[144,128]{1,0:T(1,128)}', space=vmem, size = 0x12000, scoped, tag = 'internal scratch']
  #allocation2 [shape = 'f32[512,64]{1,0:T(8,128)}', space=vmem, size = 0x40000, scoped, tag = 'scratch operand']
  %s0 = inlined_call_operand.vmem [shape: bf16[1024,32], index: 0, kind: input, shape index: {}]
  %s1 = inlined_call_operand.vmem [shape: bf16[32,64], index: 1, kind: input, shape index: {}]
  %s2 = inlined_call_operand.vmem [shape: f32[1,64], index: 2, kind: input, shape index: {}]
  %s3 = inlined_call_operand.vmem [shape: f32[1024,64], index: 3, kind: output, shape index: {}]
  %s4 = sld [smem:[#allocation0]]
  $region53: #{tpu_custom_call.1} parent=0
    _
  %s6 = ssub.s32 1, %s4
  %s7 = scalar_select 0, %s6, %s4
  loop: start=0, step=1, limit=4
  $region2: #{tpu_custom_call.1} parent=0 // loop_pre_header
    _
  $region3: #{tpu_custom_call.1} parent=0 // loop_header
    %s9 = sphi 0, %s13
    %p10 = scmp.ge.s32.totalorder %s9, 4
    %s16 = sphi 0, %s35
    %s17 = sphi 0, %s31
    %s18 = sphi 0, %s27
    %s19 = sphi 0, %s16
    %s20 = sphi 0, %s17
    %s21 = sphi 0, %s18
    %s22 = sphi 0, %s19
    %s23 = sphi 0, %s20
    %s24 = sphi 0, %s21
    %s40 = sphi 0, %s42
    %s43 = sphi 0, %s40
    %s44 = sphi 0, %s43
    %s60 = sphi 0, %s44
    %s68 = sphi 0, %s70
    %s71 = sphi 0, %s68
    %s72 = sphi 0, %s71
    %s88 = sphi 0, %s72
    %s94 = sphi 0, %s96
    %s97 = sphi 0, %s94
    %s98 = sphi 0, %s97
    %s114 = sphi 0, %s98
    %s122 = sphi 0, %s124
    %s125 = sphi 0, %s122
    %s126 = sphi 0, %s125
    %s142 = sphi 0, %s126
  $region4: #{tpu_custom_call.1} parent=0 // loop_header_branch
    %12 = sbr.rel (%p10) target = $region8
  $region5: #{tpu_custom_call.1} parent=0 // loop_body
    %s14 = ssub.s32 %s9, 1
    %s15 = ssub.s32 %s9, 2
    %s25 = sadd.s32 1, %s18
    %p26 = scmp.ge.s32.totalorder %s25, 1
    %s27 = scalar_select %p26, 0, %s25
    %s28 = sadd.s32 1, %s17
    %s29 = scalar_select %p26, %s28, %s17
    %p30 = scmp.ge.s32.totalorder %s29, 1
    %s31 = scalar_select %p30, 0, %s29
    %s32 = sadd.s32 1, %s16
    %s33 = scalar_select %p30, %s32, %s16
    %p34 = scmp.ge.s32.totalorder %s33, 2
    %s35 = scalar_select %p34, 0, %s33
    %s36 = ssub.s32 %s16, %s35
    %s37 = ssub.s32 %s18, %s27
    %s38 = sor.u32 %s36, %s37
    %p39 = scmp.eq.s32.totalorder %s38, 0
    %s41 = sadd.s32 %s40, 1
    %s42 = scalar_select %p39, %s40, %s41
    %p45 = pneg %p39
    %p46 = scmp.eq.s32.totalorder %s9, 1
    %p47 = por %p45, %p46
    %p48 = scmp.ne.s32.totalorder %s40, %s43
    %p49 = scmp.eq.s32.totalorder %s9, 0
    %p50 = por %p48, %p49
    %p51 = scmp.ne.s32.totalorder %s40, %s43
    %p52 = scmp.eq.s32.totalorder %s14, 1
    %p53 = por %p51, %p52
    %p54 = scmp.ne.s32.totalorder %s43, %s44
    %p55 = scmp.eq.s32.totalorder %s14, 0
    %p56 = por %p54, %p55
    %p57 = scmp.ne.s32.totalorder %s43, %s44
    %p58 = scmp.eq.s32.totalorder %s15, 1
    %p59 = por %p57, %p58
    %p61 = scmp.ne.s32.totalorder %s44, %s60
    %p62 = scmp.eq.s32.totalorder %s15, 0
    %p63 = por %p61, %p62
    %s64 = ssub.s32 %s18, %s27
    %s65 = ssub.s32 %s17, %s31
    %s66 = sor.u32 %s64, %s65
    %p67 = scmp.eq.s32.totalorder %s66, 0
    %s69 = sadd.s32 %s68, 1
    %s70 = scalar_select %p67, %s68, %s69
    %p73 = pneg %p67
    %p74 = scmp.eq.s32.totalorder %s9, 1
    %p75 = por %p73, %p74
    %p76 = scmp.ne.s32.totalorder %s68, %s71
    %p77 = scmp.eq.s32.totalorder %s9, 0
    %p78 = por %p76, %p77
    %p79 = scmp.ne.s32.totalorder %s68, %s71
    %p80 = scmp.eq.s32.totalorder %s14, 1
    %p81 = por %p79, %p80
    %p82 = scmp.ne.s32.totalorder %s71, %s72
    %p83 = scmp.eq.s32.totalorder %s14, 0
    %p84 = por %p82, %p83
    %p85 = scmp.ne.s32.totalorder %s71, %s72
    %p86 = scmp.eq.s32.totalorder %s15, 1
    %p87 = por %p85, %p86
    %p89 = scmp.ne.s32.totalorder %s72, %s88
    %p90 = scmp.eq.s32.totalorder %s15, 0
    %p91 = por %p89, %p90
    %s92 = ssub.s32 %s17, %s31
    %p93 = scmp.eq.s32.totalorder %s92, 0
    %s95 = sadd.s32 %s94, 1
    %s96 = scalar_select %p93, %s94, %s95
    %p99 = pneg %p93
    %p100 = scmp.eq.s32.totalorder %s9, 1
    %p101 = por %p99, %p100
    %p102 = scmp.ne.s32.totalorder %s94, %s97
    %p103 = scmp.eq.s32.totalorder %s9, 0
    %p104 = por %p102, %p103
    %p105 = scmp.ne.s32.totalorder %s94, %s97
    %p106 = scmp.eq.s32.totalorder %s14, 1
    %p107 = por %p105, %p106
    %p108 = scmp.ne.s32.totalorder %s97, %s98
    %p109 = scmp.eq.s32.totalorder %s14, 0
    %p110 = por %p108, %p109
    %p111 = scmp.ne.s32.totalorder %s97, %s98
    %p112 = scmp.eq.s32.totalorder %s15, 1
    %p113 = por %p111, %p112
    %p115 = scmp.ne.s32.totalorder %s98, %s114
    %p116 = scmp.eq.s32.totalorder %s15, 0
    %p117 = por %p115, %p116
    %s118 = ssub.s32 %s16, %s35
    %s119 = ssub.s32 %s17, %s31
    %s120 = sor.u32 %s118, %s119
    %p121 = scmp.eq.s32.totalorder %s120, 0
    %s123 = sadd.s32 %s122, 1
    %s124 = scalar_select %p121, %s122, %s123
    %p127 = pneg %p121
    %p128 = scmp.eq.s32.totalorder %s9, 1
    %p129 = por %p127, %p128
    %p130 = scmp.ne.s32.totalorder %s122, %s125
    %p131 = scmp.eq.s32.totalorder %s9, 0
    %p132 = por %p130, %p131
    %p133 = scmp.ne.s32.totalorder %s122, %s125
    %p134 = scmp.eq.s32.totalorder %s14, 1
    %p135 = por %p133, %p134
    %p136 = scmp.ne.s32.totalorder %s125, %s126
    %p137 = scmp.eq.s32.totalorder %s14, 0
    %p138 = por %p136, %p137
    %p139 = scmp.ne.s32.totalorder %s125, %s126
    %p140 = scmp.eq.s32.totalorder %s15, 1
    %p141 = por %p139, %p140
    %p143 = scmp.ne.s32.totalorder %s126, %s142
    %p144 = scmp.eq.s32.totalorder %s15, 0
    %p145 = por %p143, %p144
    %p146 = scmp.le.s32.totalorder 1, %s9
    %p147 = scmp.lt.s32.totalorder %s9, 3
    %p148 = pnand %p146, %p147
    %p149 = pneg %p148
    // Predicated region
    $region9: #{tpu_custom_call.1} parent=5 // pred_check
      _
    $region10: #{tpu_custom_call.1} parent=5 // pred_check_branch
      %151 = sbr.rel (%p148) target = $region12
    $region11: #{tpu_custom_call.1} parent=5 // pred_region
      %s152 = ssub.s32 %s9, 1
      // Predicated region
      $region13: #{tpu_custom_call.1} parent=11 // pred_check
        %p153 = pneg %p84
      $region14: #{tpu_custom_call.1} parent=11 // pred_check_branch
        %155 = sbr.rel (%p153) target = $region16
      $region15: #{tpu_custom_call.1} parent=11 // pred_region
        %s156 = smul.u32 4, %s21
        %p157 = scmp.lt.s32.totalorder %s156, 3
        %s158 = scalar_select %p157, %s156, 3
        %p159 = scmp.lt.s32.totalorder %s20, 0
        %s160 = scalar_select %p159, %s20, 0
        %s161 = sadd.s32 %s160, %s158
        %s162 = smul.addr %s161, 4
        %s163 = scalar_lea.vmem %s1, %s162
        %s164 = smul.u32 4, %s21
      $region16: #{tpu_custom_call.1} parent=11 // pred_fallthru
        _
      // Predicated region
      $region17: #{tpu_custom_call.1} parent=11 // pred_check
        %p165 = pneg %p110
      $region18: #{tpu_custom_call.1} parent=11 // pred_check_branch
        %167 = sbr.rel (%p165) target = $region20
      $region19: #{tpu_custom_call.1} parent=11 // pred_region
        %p168 = scmp.lt.s32.totalorder %s20, 0
        %s169 = scalar_select %p168, %s20, 0
        %s170 = scalar_lea.vmem %s2, %s169
      $region20: #{tpu_custom_call.1} parent=11 // pred_fallthru
        _
    $region12: #{tpu_custom_call.1} parent=5 // pred_fallthru
      _
    %p171 = scmp.lt.s32.totalorder %s9, 2
    // Predicated region
    $region21: #{tpu_custom_call.1} parent=5 // pred_check
      %p172 = pneg %p171
    $region22: #{tpu_custom_call.1} parent=5 // pred_check_branch
      %174 = sbr.rel (%p172) target = $region24
    $region23: #{tpu_custom_call.1} parent=5 // pred_region
      // Predicated region
      $region25: #{tpu_custom_call.1} parent=23 // pred_check
        %p175 = pneg %p50
      $region26: #{tpu_custom_call.1} parent=23 // pred_check_branch
        %177 = sbr.rel (%p175) target = $region28
      $region27: #{tpu_custom_call.1} parent=23 // pred_region
        %s178 = smul.u32 64, %s16
        %p179 = scmp.lt.s32.totalorder %s178, 127
        %s180 = scalar_select %p179, %s178, 127
        %p181 = scmp.lt.s32.totalorder %s18, 0
        %s182 = scalar_select %p181, %s18, 0
        %s183 = sadd.s32 %s182, %s180
        %s184 = smul.addr %s183, 4
        %s185 = scalar_lea.vmem %s0, %s184
        %s186 = smul.u32 64, %s16
      $region28: #{tpu_custom_call.1} parent=23 // pred_fallthru
        _
    $region24: #{tpu_custom_call.1} parent=5 // pred_fallthru
      _
    %p187 = scmp.le.s32.totalorder 1, %s9
    %p188 = scmp.lt.s32.totalorder %s9, 3
    %p189 = pnand %p187, %p188
    %p190 = pneg %p189
    // Predicated region
    $region29: #{tpu_custom_call.1} parent=5 // pred_check
      _
    $region30: #{tpu_custom_call.1} parent=5 // pred_check_branch
      %192 = sbr.rel (%p189) target = $region32
    $region31: #{tpu_custom_call.1} parent=5 // pred_region
      %s193 = ssub.s32 %s9, 1
      %s194 = smul.u32 64, %s19
      %p195 = scmp.lt.s32.totalorder %s194, 127
      %s196 = scalar_select %p195, %s194, 127
      %p197 = scmp.lt.s32.totalorder %s21, 0
      %s198 = scalar_select %p197, %s21, 0
      %s199 = sadd.s32 %s198, %s196
      %s200 = smul.addr %s199, 4
      %s201 = scalar_lea.vmem %s0, %s200
      %p202 = pneg %p56
      %p203 = pneg %p53
      %s204 = smul.u32 4, %s21
      %p205 = scmp.lt.s32.totalorder %s204, 3
      %s206 = scalar_select %p205, %s204, 3
      %p207 = scmp.lt.s32.totalorder %s20, 0
      %s208 = scalar_select %p207, %s20, 0
      %s209 = sadd.s32 %s208, %s206
      %s210 = smul.addr %s209, 4
      %s211 = scalar_lea.vmem %s1, %s210
      %p212 = pneg %p84
      %p213 = pneg %p81
      %p214 = scmp.lt.s32.totalorder %s20, 0
      %s215 = scalar_select %p214, %s20, 0
      %s216 = scalar_lea.vmem %s2, %s215
      %p217 = pneg %p110
      %p218 = pneg %p107
      %p219 = pneg %p138
      %p220 = pneg %p135
      %s221 = smul.u32 64, %s19
      %p222 = scmp.lt.s32.totalorder %s221, 127
      %s223 = scalar_select %p222, %s221, 127
      %p224 = scmp.lt.s32.totalorder %s20, 0
      %s225 = scalar_select %p224, %s20, 0
      %s226 = sadd.s32 %s225, %s223
      %s227 = smul.addr %s226, 8
      %s228 = scalar_lea.vmem %s3, %s227
      %s229 = smul.u32 64, %s19
      %p230 = scmp.lt.s32.totalorder %s229, 127
      %s231 = scalar_select %p230, %s229, 127
      %p232 = scmp.lt.s32.totalorder %s21, 0
      %s233 = scalar_select %p232, %s21, 0
      %s234 = sadd.s32 %s233, %s231
      %s235 = smul.addr %s234, 4
      %s236 = scalar_lea.vmem %s0, %s235
      %s237 = smul.u32 64, %s19
      %s238 = smul.u32 4, %s21
      %p239 = scmp.lt.s32.totalorder %s238, 3
      %s240 = scalar_select %p239, %s238, 3
      %p241 = scmp.lt.s32.totalorder %s20, 0
      %s242 = scalar_select %p241, %s20, 0
      %s243 = sadd.s32 %s242, %s240
      %s244 = smul.addr %s243, 4
      %s245 = scalar_lea.vmem %s1, %s244
      %s246 = smul.u32 4, %s21
      %p247 = scmp.lt.s32.totalorder %s20, 0
      %s248 = scalar_select %p247, %s20, 0
      %s249 = scalar_lea.vmem %s2, %s248
      %s250 = smul.u32 64, %s19
      %p251 = scmp.lt.s32.totalorder %s250, 127
      %s252 = scalar_select %p251, %s250, 127
      %p253 = scmp.lt.s32.totalorder %s20, 0
      %s254 = scalar_select %p253, %s20, 0
      %s255 = sadd.s32 %s254, %s252
      %s256 = smul.addr %s255, 8
      %s257 = scalar_lea.vmem %s3, %s256
      %s258 = smul.u32 64, %s19
      %p260 = scmp.eq.s32.totalorder %s21, 0
      // Predicated region
      $region33: #{tpu_custom_call.1} parent=31 // pred_check
        %p261 = pneg %p260
      $region34: #{tpu_custom_call.1} parent=31 // pred_check_branch
        %263 = sbr.rel (%p261) target = $region36
      $region35: #{tpu_custom_call.1} parent=31 // pred_region
        %v264 = vld [vmem:[%s249] sm:$0x1]
        %v266 = vlaneseq
        %v267 = vshrl.u32 %v266, 7
        %v268 = vsub.s32 0, %v267
        %v269 = vrot.slane %v264, %v268
        %vm271 = vcmask 523264
        %272 = vst.msk [vmem:[#allocation2] sm:$0xff] %vm271, %v269
        %273 = vst.msk [vmem:[#allocation2 + $0x8] sm:$0xff] %vm271, %v269
        %274 = vst.msk [vmem:[#allocation2 + $0x10] sm:$0xff] %vm271, %v269
        %275 = vst.msk [vmem:[#allocation2 + $0x18] sm:$0xff] %vm271, %v269
        %276 = vst.msk [vmem:[#allocation2 + $0x20] sm:$0xff] %vm271, %v269
        %277 = vst.msk [vmem:[#allocation2 + $0x28] sm:$0xff] %vm271, %v269
        %278 = vst.msk [vmem:[#allocation2 + $0x30] sm:$0xff] %vm271, %v269
        %279 = vst.msk [vmem:[#allocation2 + $0x38] sm:$0xff] %vm271, %v269
        %280 = vst.msk [vmem:[#allocation2 + $0x40] sm:$0xff] %vm271, %v269
        %281 = vst.msk [vmem:[#allocation2 + $0x48] sm:$0xff] %vm271, %v269
        %282 = vst.msk [vmem:[#allocation2 + $0x50] sm:$0xff] %vm271, %v269
        %283 = vst.msk [vmem:[#allocation2 + $0x58] sm:$0xff] %vm271, %v269
        %284 = vst.msk [vmem:[#allocation2 + $0x60] sm:$0xff] %vm271, %v269
        %285 = vst.msk [vmem:[#allocation2 + $0x68] sm:$0xff] %vm271, %v269
        %286 = vst.msk [vmem:[#allocation2 + $0x70] sm:$0xff] %vm271, %v269
        %287 = vst.msk [vmem:[#allocation2 + $0x78] sm:$0xff] %vm271, %v269
        %288 = vst.msk [vmem:[#allocation2 + $0x80] sm:$0xff] %vm271, %v269
        %289 = vst.msk [vmem:[#allocation2 + $0x88] sm:$0xff] %vm271, %v269
        %290 = vst.msk [vmem:[#allocation2 + $0x90] sm:$0xff] %vm271, %v269
        %291 = vst.msk [vmem:[#allocation2 + $0x98] sm:$0xff] %vm271, %v269
        %292 = vst.msk [vmem:[#allocation2 + $0xa0] sm:$0xff] %vm271, %v269
        %293 = vst.msk [vmem:[#allocation2 + $0xa8] sm:$0xff] %vm271, %v269
        %294 = vst.msk [vmem:[#allocation2 + $0xb0] sm:$0xff] %vm271, %v269
        %295 = vst.msk [vmem:[#allocation2 + $0xb8] sm:$0xff] %vm271, %v269
        %296 = vst.msk [vmem:[#allocation2 + $0xc0] sm:$0xff] %vm271, %v269
        %297 = vst.msk [vmem:[#allocation2 + $0xc8] sm:$0xff] %vm271, %v269
        %298 = vst.msk [vmem:[#allocation2 + $0xd0] sm:$0xff] %vm271, %v269
        %299 = vst.msk [vmem:[#allocation2 + $0xd8] sm:$0xff] %vm271, %v269
        %300 = vst.msk [vmem:[#allocation2 + $0xe0] sm:$0xff] %vm271, %v269
        %301 = vst.msk [vmem:[#allocation2 + $0xe8] sm:$0xff] %vm271, %v269
        %302 = vst.msk [vmem:[#allocation2 + $0xf0] sm:$0xff] %vm271, %v269
        %303 = vst.msk [vmem:[#allocation2 + $0xf8] sm:$0xff] %vm271, %v269
        %304 = vst.msk [vmem:[#allocation2 + $0x100] sm:$0xff] %vm271, %v269
        %305 = vst.msk [vmem:[#allocation2 + $0x108] sm:$0xff] %vm271, %v269
        %306 = vst.msk [vmem:[#allocation2 + $0x110] sm:$0xff] %vm271, %v269
        %307 = vst.msk [vmem:[#allocation2 + $0x118] sm:$0xff] %vm271, %v269
        %308 = vst.msk [vmem:[#allocation2 + $0x120] sm:$0xff] %vm271, %v269
        %309 = vst.msk [vmem:[#allocation2 + $0x128] sm:$0xff] %vm271, %v269
        %310 = vst.msk [vmem:[#allocation2 + $0x130] sm:$0xff] %vm271, %v269
        %311 = vst.msk [vmem:[#allocation2 + $0x138] sm:$0xff] %vm271, %v269
        %312 = vst.msk [vmem:[#allocation2 + $0x140] sm:$0xff] %vm271, %v269
        %313 = vst.msk [vmem:[#allocation2 + $0x148] sm:$0xff] %vm271, %v269
        %314 = vst.msk [vmem:[#allocation2 + $0x150] sm:$0xff] %vm271, %v269
        %315 = vst.msk [vmem:[#allocation2 + $0x158] sm:$0xff] %vm271, %v269
        %316 = vst.msk [vmem:[#allocation2 + $0x160] sm:$0xff] %vm271, %v269
        %317 = vst.msk [vmem:[#allocation2 + $0x168] sm:$0xff] %vm271, %v269
        %318 = vst.msk [vmem:[#allocation2 + $0x170] sm:$0xff] %vm271, %v269
        %319 = vst.msk [vmem:[#allocation2 + $0x178] sm:$0xff] %vm271, %v269
        %320 = vst.msk [vmem:[#allocation2 + $0x180] sm:$0xff] %vm271, %v269
        %321 = vst.msk [vmem:[#allocation2 + $0x188] sm:$0xff] %vm271, %v269
        %322 = vst.msk [vmem:[#allocation2 + $0x190] sm:$0xff] %vm271, %v269
        %323 = vst.msk [vmem:[#allocation2 + $0x198] sm:$0xff] %vm271, %v269
        %324 = vst.msk [vmem:[#allocation2 + $0x1a0] sm:$0xff] %vm271, %v269
        %325 = vst.msk [vmem:[#allocation2 + $0x1a8] sm:$0xff] %vm271, %v269
        %326 = vst.msk [vmem:[#allocation2 + $0x1b0] sm:$0xff] %vm271, %v269
        %327 = vst.msk [vmem:[#allocation2 + $0x1b8] sm:$0xff] %vm271, %v269
        %328 = vst.msk [vmem:[#allocation2 + $0x1c0] sm:$0xff] %vm271, %v269
        %329 = vst.msk [vmem:[#allocation2 + $0x1c8] sm:$0xff] %vm271, %v269
        %330 = vst.msk [vmem:[#allocation2 + $0x1d0] sm:$0xff] %vm271, %v269
        %331 = vst.msk [vmem:[#allocation2 + $0x1d8] sm:$0xff] %vm271, %v269
        %332 = vst.msk [vmem:[#allocation2 + $0x1e0] sm:$0xff] %vm271, %v269
        %333 = vst.msk [vmem:[#allocation2 + $0x1e8] sm:$0xff] %vm271, %v269
        %334 = vst.msk [vmem:[#allocation2 + $0x1f0] sm:$0xff] %vm271, %v269
        %335 = vst.msk [vmem:[#allocation2 + $0x1f8] sm:$0xff] %vm271, %v269
      $region36: #{tpu_custom_call.1} parent=31 // pred_fallthru
        _
      %v336 = vld [vmem:[#allocation2] sm:$0xff]
      %v337 = vld [vmem:[#allocation2 + $0x8] sm:$0xff]
      %v338 = vld [vmem:[#allocation2 + $0x10] sm:$0xff]
      %v339 = vld [vmem:[#allocation2 + $0x18] sm:$0xff]
      %v340 = vld [vmem:[#allocation2 + $0x20] sm:$0xff]
      %v341 = vld [vmem:[#allocation2 + $0x28] sm:$0xff]
      %v342 = vld [vmem:[#allocation2 + $0x30] sm:$0xff]
      %v343 = vld [vmem:[#allocation2 + $0x38] sm:$0xff]
      %v344 = vld [vmem:[#allocation2 + $0x40] sm:$0xff]
      %v345 = vld [vmem:[#allocation2 + $0x48] sm:$0xff]
      %v346 = vld [vmem:[#allocation2 + $0x50] sm:$0xff]
      %v347 = vld [vmem:[#allocation2 + $0x58] sm:$0xff]
      %v348 = vld [vmem:[#allocation2 + $0x60] sm:$0xff]
      %v349 = vld [vmem:[#allocation2 + $0x68] sm:$0xff]
      %v350 = vld [vmem:[#allocation2 + $0x70] sm:$0xff]
      %v351 = vld [vmem:[#allocation2 + $0x78] sm:$0xff]
      %v352 = vld [vmem:[#allocation2 + $0x80] sm:$0xff]
      %v353 = vld [vmem:[#allocation2 + $0x88] sm:$0xff]
      %v354 = vld [vmem:[#allocation2 + $0x90] sm:$0xff]
      %v355 = vld [vmem:[#allocation2 + $0x98] sm:$0xff]
      %v356 = vld [vmem:[#allocation2 + $0xa0] sm:$0xff]
      %v357 = vld [vmem:[#allocation2 + $0xa8] sm:$0xff]
      %v358 = vld [vmem:[#allocation2 + $0xb0] sm:$0xff]
      %v359 = vld [vmem:[#allocation2 + $0xb8] sm:$0xff]
      %v360 = vld [vmem:[#allocation2 + $0xc0] sm:$0xff]
      %v361 = vld [vmem:[#allocation2 + $0xc8] sm:$0xff]
      %v362 = vld [vmem:[#allocation2 + $0xd0] sm:$0xff]
      %v363 = vld [vmem:[#allocation2 + $0xd8] sm:$0xff]
      %v364 = vld [vmem:[#allocation2 + $0xe0] sm:$0xff]
      %v365 = vld [vmem:[#allocation2 + $0xe8] sm:$0xff]
      %v366 = vld [vmem:[#allocation2 + $0xf0] sm:$0xff]
      %v367 = vld [vmem:[#allocation2 + $0xf8] sm:$0xff]
      %v368 = vld [vmem:[#allocation2 + $0x100] sm:$0xff]
      %v369 = vld [vmem:[#allocation2 + $0x108] sm:$0xff]
      %v370 = vld [vmem:[#allocation2 + $0x110] sm:$0xff]
      %v371 = vld [vmem:[#allocation2 + $0x118] sm:$0xff]
      %v372 = vld [vmem:[#allocation2 + $0x120] sm:$0xff]
      %v373 = vld [vmem:[#allocation2 + $0x128] sm:$0xff]
      %v374 = vld [vmem:[#allocation2 + $0x130] sm:$0xff]
      %v375 = vld [vmem:[#allocation2 + $0x138] sm:$0xff]
      %v376 = vld [vmem:[#allocation2 + $0x140] sm:$0xff]
      %v377 = vld [vmem:[#allocation2 + $0x148] sm:$0xff]
      %v378 = vld [vmem:[#allocation2 + $0x150] sm:$0xff]
      %v379 = vld [vmem:[#allocation2 + $0x158] sm:$0xff]
      %v380 = vld [vmem:[#allocation2 + $0x160] sm:$0xff]
      %v381 = vld [vmem:[#allocation2 + $0x168] sm:$0xff]
      %v382 = vld [vmem:[#allocation2 + $0x170] sm:$0xff]
      %v383 = vld [vmem:[#allocation2 + $0x178] sm:$0xff]
      %v384 = vld [vmem:[#allocation2 + $0x180] sm:$0xff]
      %v385 = vld [vmem:[#allocation2 + $0x188] sm:$0xff]
      %v386 = vld [vmem:[#allocation2 + $0x190] sm:$0xff]
      %v387 = vld [vmem:[#allocation2 + $0x198] sm:$0xff]
      %v388 = vld [vmem:[#allocation2 + $0x1a0] sm:$0xff]
      %v389 = vld [vmem:[#allocation2 + $0x1a8] sm:$0xff]
      %v390 = vld [vmem:[#allocation2 + $0x1b0] sm:$0xff]
      %v391 = vld [vmem:[#allocation2 + $0x1b8] sm:$0xff]
      %v392 = vld [vmem:[#allocation2 + $0x1c0] sm:$0xff]
      %v393 = vld [vmem:[#allocation2 + $0x1c8] sm:$0xff]
      %v394 = vld [vmem:[#allocation2 + $0x1d0] sm:$0xff]
      %v395 = vld [vmem:[#allocation2 + $0x1d8] sm:$0xff]
      %v396 = vld [vmem:[#allocation2 + $0x1e0] sm:$0xff]
      %v397 = vld [vmem:[#allocation2 + $0x1e8] sm:$0xff]
      %v398 = vld [vmem:[#allocation2 + $0x1f0] sm:$0xff]
      %v399 = vld [vmem:[#allocation2 + $0x1f8] sm:$0xff]
      %v400 = vld [vmem:[%s236] sm:$0xf]
      %v401 = vld [vmem:[%s236 + $0x4] sm:$0xf]
      %v402 = vld [vmem:[%s236 + $0x8] sm:$0xf]
      %v403 = vld [vmem:[%s236 + $0xc] sm:$0xf]
      %v404 = vld [vmem:[%s236 + $0x10] sm:$0xf]
      %v405 = vld [vmem:[%s236 + $0x14] sm:$0xf]
      %v406 = vld [vmem:[%s236 + $0x18] sm:$0xf]
      %v407 = vld [vmem:[%s236 + $0x1c] sm:$0xf]
      %v408 = vld [vmem:[%s236 + $0x20] sm:$0xf]
      %v409 = vld [vmem:[%s236 + $0x24] sm:$0xf]
      %v410 = vld [vmem:[%s236 + $0x28] sm:$0xf]
      %v411 = vld [vmem:[%s236 + $0x2c] sm:$0xf]
      %v412 = vld [vmem:[%s236 + $0x30] sm:$0xf]
      %v413 = vld [vmem:[%s236 + $0x34] sm:$0xf]
      %v414 = vld [vmem:[%s236 + $0x38] sm:$0xf]
      %v415 = vld [vmem:[%s236 + $0x3c] sm:$0xf]
      %v416 = vld [vmem:[%s236 + $0x40] sm:$0xf]
      %v417 = vld [vmem:[%s236 + $0x44] sm:$0xf]
      %v418 = vld [vmem:[%s236 + $0x48] sm:$0xf]
      %v419 = vld [vmem:[%s236 + $0x4c] sm:$0xf]
      %v420 = vld [vmem:[%s236 + $0x50] sm:$0xf]
      %v421 = vld [vmem:[%s236 + $0x54] sm:$0xf]
      %v422 = vld [vmem:[%s236 + $0x58] sm:$0xf]
      %v423 = vld [vmem:[%s236 + $0x5c] sm:$0xf]
      %v424 = vld [vmem:[%s236 + $0x60] sm:$0xf]
      %v425 = vld [vmem:[%s236 + $0x64] sm:$0xf]
      %v426 = vld [vmem:[%s236 + $0x68] sm:$0xf]
      %v427 = vld [vmem:[%s236 + $0x6c] sm:$0xf]
      %v428 = vld [vmem:[%s236 + $0x70] sm:$0xf]
      %v429 = vld [vmem:[%s236 + $0x74] sm:$0xf]
      %v430 = vld [vmem:[%s236 + $0x78] sm:$0xf]
      %v431 = vld [vmem:[%s236 + $0x7c] sm:$0xf]
      %v432 = vld [vmem:[%s236 + $0x80] sm:$0xf]
      %v433 = vld [vmem:[%s236 + $0x84] sm:$0xf]
      %v434 = vld [vmem:[%s236 + $0x88] sm:$0xf]
      %v435 = vld [vmem:[%s236 + $0x8c] sm:$0xf]
      %v436 = vld [vmem:[%s236 + $0x90] sm:$0xf]
      %v437 = vld [vmem:[%s236 + $0x94] sm:$0xf]
      %v438 = vld [vmem:[%s236 + $0x98] sm:$0xf]
      %v439 = vld [vmem:[%s236 + $0x9c] sm:$0xf]
      %v440 = vld [vmem:[%s236 + $0xa0] sm:$0xf]
      %v441 = vld [vmem:[%s236 + $0xa4] sm:$0xf]
      %v442 = vld [vmem:[%s236 + $0xa8] sm:$0xf]
      %v443 = vld [vmem:[%s236 + $0xac] sm:$0xf]
      %v444 = vld [vmem:[%s236 + $0xb0] sm:$0xf]
      %v445 = vld [vmem:[%s236 + $0xb4] sm:$0xf]
      %v446 = vld [vmem:[%s236 + $0xb8] sm:$0xf]
      %v447 = vld [vmem:[%s236 + $0xbc] sm:$0xf]
      %v448 = vld [vmem:[%s236 + $0xc0] sm:$0xf]
      %v449 = vld [vmem:[%s236 + $0xc4] sm:$0xf]
      %v450 = vld [vmem:[%s236 + $0xc8] sm:$0xf]
      %v451 = vld [vmem:[%s236 + $0xcc] sm:$0xf]
      %v452 = vld [vmem:[%s236 + $0xd0] sm:$0xf]
      %v453 = vld [vmem:[%s236 + $0xd4] sm:$0xf]
      %v454 = vld [vmem:[%s236 + $0xd8] sm:$0xf]
      %v455 = vld [vmem:[%s236 + $0xdc] sm:$0xf]
      %v456 = vld [vmem:[%s236 + $0xe0] sm:$0xf]
      %v457 = vld [vmem:[%s236 + $0xe4] sm:$0xf]
      %v458 = vld [vmem:[%s236 + $0xe8] sm:$0xf]
      %v459 = vld [vmem:[%s236 + $0xec] sm:$0xf]
      %v460 = vld [vmem:[%s236 + $0xf0] sm:$0xf]
      %v461 = vld [vmem:[%s236 + $0xf4] sm:$0xf]
      %v462 = vld [vmem:[%s236 + $0xf8] sm:$0xf]
      %v463 = vld [vmem:[%s236 + $0xfc] sm:$0xf]
      %v464 = vld [vmem:[%s245] sm:$0xf]
      %v465 = vld [vmem:[%s245 + $0x4] sm:$0xf]
      %v466 = vld [vmem:[%s245 + $0x8] sm:$0xf]
      %v467 = vld [vmem:[%s245 + $0xc] sm:$0xf]
      %v532 = vunpack.c.l.b16 %v400
      %v533 = vunpack.c.l.b16 %v401
      %v534 = vunpack.c.l.b16 %v402
      %v535 = vunpack.c.l.b16 %v403
      %v536 = vunpack.c.l.b16 %v404
      %v537 = vunpack.c.l.b16 %v405
      %v538 = vunpack.c.l.b16 %v406
      %v539 = vunpack.c.l.b16 %v407
      %v540 = vunpack.c.l.b16 %v408
      %v541 = vunpack.c.l.b16 %v409
      %v542 = vunpack.c.l.b16 %v410
      %v543 = vunpack.c.l.b16 %v411
      %v544 = vunpack.c.l.b16 %v412
      %v545 = vunpack.c.l.b16 %v413
      %v546 = vunpack.c.l.b16 %v414
      %v547 = vunpack.c.l.b16 %v415
      %v548 = vunpack.c.l.b16 %v416
      %v549 = vunpack.c.l.b16 %v417
      %v550 = vunpack.c.l.b16 %v418
      %v551 = vunpack.c.l.b16 %v419
      %v552 = vunpack.c.l.b16 %v420
      %v553 = vunpack.c.l.b16 %v421
      %v554 = vunpack.c.l.b16 %v422
      %v555 = vunpack.c.l.b16 %v423
      %v556 = vunpack.c.l.b16 %v424
      %v557 = vunpack.c.l.b16 %v425
      %v558 = vunpack.c.l.b16 %v426
      %v559 = vunpack.c.l.b16 %v427
      %v560 = vunpack.c.l.b16 %v428
      %v561 = vunpack.c.l.b16 %v429
      %v562 = vunpack.c.l.b16 %v430
      %v563 = vunpack.c.l.b16 %v431
      %v564 = vunpack.c.l.b16 %v432
      %v565 = vunpack.c.l.b16 %v433
      %v566 = vunpack.c.l.b16 %v434
      %v567 = vunpack.c.l.b16 %v435
      %v568 = vunpack.c.l.b16 %v436
      %v569 = vunpack.c.l.b16 %v437
      %v570 = vunpack.c.l.b16 %v438
      %v571 = vunpack.c.l.b16 %v439
      %v572 = vunpack.c.l.b16 %v440
      %v573 = vunpack.c.l.b16 %v441
      %v574 = vunpack.c.l.b16 %v442
      %v575 = vunpack.c.l.b16 %v443
      %v576 = vunpack.c.l.b16 %v444
      %v577 = vunpack.c.l.b16 %v445
      %v578 = vunpack.c.l.b16 %v446
      %v579 = vunpack.c.l.b16 %v447
      %v580 = vunpack.c.l.b16 %v448
      %v581 = vunpack.c.l.b16 %v449
      %v582 = vunpack.c.l.b16 %v450
      %v583 = vunpack.c.l.b16 %v451
      %v584 = vunpack.c.l.b16 %v452
      %v585 = vunpack.c.l.b16 %v453
      %v586 = vunpack.c.l.b16 %v454
      %v587 = vunpack.c.l.b16 %v455
      %v588 = vunpack.c.l.b16 %v456
      %v589 = vunpack.c.l.b16 %v457
      %v590 = vunpack.c.l.b16 %v458
      %v591 = vunpack.c.l.b16 %v459
      %v592 = vunpack.c.l.b16 %v460
      %v593 = vunpack.c.l.b16 %v461
      %v594 = vunpack.c.l.b16 %v462
      %v595 = vunpack.c.l.b16 %v463
      %v596 = vpack.c.b16 %v533, %v532
      %v597 = vpack.c.b16 %v535, %v534
      %v598 = vpack.c.b16 %v537, %v536
      %v599 = vpack.c.b16 %v539, %v538
      %v600 = vpack.c.b16 %v541, %v540
      %v601 = vpack.c.b16 %v543, %v542
      %v602 = vpack.c.b16 %v545, %v544
      %v603 = vpack.c.b16 %v547, %v546
      %v604 = vpack.c.b16 %v549, %v548
      %v605 = vpack.c.b16 %v551, %v550
      %v606 = vpack.c.b16 %v553, %v552
      %v607 = vpack.c.b16 %v555, %v554
      %v608 = vpack.c.b16 %v557, %v556
      %v609 = vpack.c.b16 %v559, %v558
      %v610 = vpack.c.b16 %v561, %v560
      %v611 = vpack.c.b16 %v563, %v562
      %v612 = vpack.c.b16 %v565, %v564
      %v613 = vpack.c.b16 %v567, %v566
      %v614 = vpack.c.b16 %v569, %v568
      %v615 = vpack.c.b16 %v571, %v570
      %v616 = vpack.c.b16 %v573, %v572
      %v617 = vpack.c.b16 %v575, %v574
      %v618 = vpack.c.b16 %v577, %v576
      %v619 = vpack.c.b16 %v579, %v578
      %v620 = vpack.c.b16 %v581, %v580
      %v621 = vpack.c.b16 %v583, %v582
      %v622 = vpack.c.b16 %v585, %v584
      %v623 = vpack.c.b16 %v587, %v586
      %v624 = vpack.c.b16 %v589, %v588
      %v625 = vpack.c.b16 %v591, %v590
      %v626 = vpack.c.b16 %v593, %v592
      %v627 = vpack.c.b16 %v595, %v594
      %v632 = vunpack.c.l.b16 %v464
      %v633 = vunpack.c.l.b16 %v465
      %v634 = vunpack.c.l.b16 %v466
      %v635 = vunpack.c.l.b16 %v467
      %v636 = vpack.c.b16 %v633, %v632
      %v637 = vpack.c.b16 %v635, %v634
      %vm640 = vcmask 261120
      %v642 = vsel %vm640, %v596, 0
      %v645 = vsel %vm640, %v597, 0
      %v648 = vsel %vm640, %v598, 0
      %v651 = vsel %vm640, %v599, 0
      %v654 = vsel %vm640, %v600, 0
      %v657 = vsel %vm640, %v601, 0
      %v660 = vsel %vm640, %v602, 0
      %v663 = vsel %vm640, %v603, 0
      %v666 = vsel %vm640, %v604, 0
      %v669 = vsel %vm640, %v605, 0
      %v672 = vsel %vm640, %v606, 0
      %v675 = vsel %vm640, %v607, 0
      %v678 = vsel %vm640, %v608, 0
      %v681 = vsel %vm640, %v609, 0
      %v684 = vsel %vm640, %v610, 0
      %v687 = vsel %vm640, %v611, 0
      %v690 = vsel %vm640, %v612, 0
      %v693 = vsel %vm640, %v613, 0
      %v696 = vsel %vm640, %v614, 0
      %v699 = vsel %vm640, %v615, 0
      %v702 = vsel %vm640, %v616, 0
      %v705 = vsel %vm640, %v617, 0
      %v708 = vsel %vm640, %v618, 0
      %v711 = vsel %vm640, %v619, 0
      %v714 = vsel %vm640, %v620, 0
      %v717 = vsel %vm640, %v621, 0
      %v720 = vsel %vm640, %v622, 0
      %v723 = vsel %vm640, %v623, 0
      %v726 = vsel %vm640, %v624, 0
      %v729 = vsel %vm640, %v625, 0
      %v732 = vsel %vm640, %v626, 0
      %v735 = vsel %vm640, %v627, 0
      %737 = vmatprep.subr.bf16.mxu0 0
      %738 = vmatpush1.bf16.msra.mxu0 0
      %739 = vmatprep.subr.bf16.mxu0 0
      %740 = vmatpush1.bf16.msra.mxu0 0
      %741 = vmatprep.subr.bf16.mxu0 0
      %742 = vmatpush1.bf16.msra.mxu0 0
      %743 = vmatprep.subr.bf16.mxu0 0
      %744 = vmatpush1.bf16.msra.mxu0 0
      %745 = vmatprep.subr.bf16.mxu0 0
      %746 = vmatpush1.bf16.msra.mxu0 0
      %747 = vmatprep.subr.bf16.mxu0 0
      %748 = vmatpush1.bf16.msra.mxu0 0
      %749 = vmatprep.subr.bf16.mxu0 0
      %750 = vmatpush1.bf16.msra.mxu0 %v637
      %751 = vmatprep.subr.bf16.mxu0 0
      %752 = vmatpush1.bf16.msra.mxu0 %v636
      %753 = vmatprep.subr.bf16.mxu0 0
      %754 = vmatpush2.bf16.msra.mxu0 0
      %755 = vmatprep.subr.bf16.mxu0 0
      %756 = vmatpush2.bf16.msra.mxu0 0
      %757 = vmatprep.subr.bf16.mxu0 0
      %758 = vmatpush2.bf16.msra.mxu0 0
      %759 = vmatprep.subr.bf16.mxu0 0
      %760 = vmatpush2.bf16.msra.mxu0 0
      %761 = vmatprep.subr.bf16.mxu0 0
      %762 = vmatpush2.bf16.msra.mxu0 0
      %763 = vmatprep.subr.bf16.mxu0 0
      %764 = vmatpush2.bf16.msra.mxu0 0
      %765 = vmatprep.subr.bf16.mxu0 0
      %766 = vmatpush2.bf16.msra.mxu0 0
      %767 = vmatprep.subr.bf16.mxu0 0
      %768 = vmatpush2.bf16.msra.mxu0 0
      %769 = vmatprep.mubr.bf16.mxu0 0
      %770 = vmatmul.mubr.bf16.gmra.mxu0 %v642
      %v771 = vpop.f32.mrf.mxu0
      %v772 = vadd.f32 0.0, %v771
      %v773 = vpop.f32.mrf.mxu0
      %v774 = vpop.f32.mrf.mxu0
      %v775 = vadd.f32 0.0, %v774
      %v776 = vpop.f32.mrf.mxu0
      %777 = vmatprep.mubr.bf16.mxu0 0
      %778 = vmatmul.mubr.bf16.gmra.mxu0 %v645
      %v779 = vpop.f32.mrf.mxu0
      %v780 = vadd.f32 0.0, %v779
      %v781 = vpop.f32.mrf.mxu0
      %v782 = vpop.f32.mrf.mxu0
      %v783 = vadd.f32 0.0, %v782
      %v784 = vpop.f32.mrf.mxu0
      %785 = vmatprep.mubr.bf16.mxu0 0
      %786 = vmatmul.mubr.bf16.gmra.mxu0 %v648
      %v787 = vpop.f32.mrf.mxu0
      %v788 = vadd.f32 0.0, %v787
      %v789 = vpop.f32.mrf.mxu0
      %v790 = vpop.f32.mrf.mxu0
      %v791 = vadd.f32 0.0, %v790
      %v792 = vpop.f32.mrf.mxu0
      %793 = vmatprep.mubr.bf16.mxu0 0
      %794 = vmatmul.mubr.bf16.gmra.mxu0 %v651
      %v795 = vpop.f32.mrf.mxu0
      %v796 = vadd.f32 0.0, %v795
      %v797 = vpop.f32.mrf.mxu0
      %v798 = vpop.f32.mrf.mxu0
      %v799 = vadd.f32 0.0, %v798
      %v800 = vpop.f32.mrf.mxu0
      %801 = vmatprep.mubr.bf16.mxu0 0
      %802 = vmatmul.mubr.bf16.gmra.mxu0 %v654
      %v803 = vpop.f32.mrf.mxu0
      %v804 = vadd.f32 0.0, %v803
      %v805 = vpop.f32.mrf.mxu0
      %v806 = vpop.f32.mrf.mxu0
      %v807 = vadd.f32 0.0, %v806
      %v808 = vpop.f32.mrf.mxu0
      %809 = vmatprep.mubr.bf16.mxu0 0
      %810 = vmatmul.mubr.bf16.gmra.mxu0 %v657
      %v811 = vpop.f32.mrf.mxu0
      %v812 = vadd.f32 0.0, %v811
      %v813 = vpop.f32.mrf.mxu0
      %v814 = vpop.f32.mrf.mxu0
      %v815 = vadd.f32 0.0, %v814
      %v816 = vpop.f32.mrf.mxu0
      %817 = vmatprep.mubr.bf16.mxu0 0
      %818 = vmatmul.mubr.bf16.gmra.mxu0 %v660
      %v819 = vpop.f32.mrf.mxu0
      %v820 = vadd.f32 0.0, %v819
      %v821 = vpop.f32.mrf.mxu0
      %v822 = vpop.f32.mrf.mxu0
      %v823 = vadd.f32 0.0, %v822
      %v824 = vpop.f32.mrf.mxu0
      %825 = vmatprep.mubr.bf16.mxu0 0
      %826 = vmatmul.mubr.bf16.gmra.mxu0 %v663
      %v827 = vpop.f32.mrf.mxu0
      %v828 = vadd.f32 0.0, %v827
      %v829 = vpop.f32.mrf.mxu0
      %v830 = vpop.f32.mrf.mxu0
      %v831 = vadd.f32 0.0, %v830
      %v832 = vpop.f32.mrf.mxu0
      %833 = vmatprep.mubr.bf16.mxu0 0
      %834 = vmatmul.mubr.bf16.gmra.mxu0 %v666
      %v835 = vpop.f32.mrf.mxu0
      %v836 = vadd.f32 0.0, %v835
      %v837 = vpop.f32.mrf.mxu0
      %v838 = vpop.f32.mrf.mxu0
      %v839 = vadd.f32 0.0, %v838
      %v840 = vpop.f32.mrf.mxu0
      %841 = vmatprep.mubr.bf16.mxu0 0
      %842 = vmatmul.mubr.bf16.gmra.mxu0 %v669
      %v843 = vpop.f32.mrf.mxu0
      %v844 = vadd.f32 0.0, %v843
      %v845 = vpop.f32.mrf.mxu0
      %v846 = vpop.f32.mrf.mxu0
      %v847 = vadd.f32 0.0, %v846
      %v848 = vpop.f32.mrf.mxu0
      %849 = vmatprep.mubr.bf16.mxu0 0
      %850 = vmatmul.mubr.bf16.gmra.mxu0 %v672
      %v851 = vpop.f32.mrf.mxu0
      %v852 = vadd.f32 0.0, %v851
      %v853 = vpop.f32.mrf.mxu0
      %v854 = vpop.f32.mrf.mxu0
      %v855 = vadd.f32 0.0, %v854
      %v856 = vpop.f32.mrf.mxu0
      %857 = vmatprep.mubr.bf16.mxu0 0
      %858 = vmatmul.mubr.bf16.gmra.mxu0 %v675
      %v859 = vpop.f32.mrf.mxu0
      %v860 = vadd.f32 0.0, %v859
      %v861 = vpop.f32.mrf.mxu0
      %v862 = vpop.f32.mrf.mxu0
      %v863 = vadd.f32 0.0, %v862
      %v864 = vpop.f32.mrf.mxu0
      %865 = vmatprep.mubr.bf16.mxu0 0
      %866 = vmatmul.mubr.bf16.gmra.mxu0 %v678
      %v867 = vpop.f32.mrf.mxu0
      %v868 = vadd.f32 0.0, %v867
      %v869 = vpop.f32.mrf.mxu0
      %v870 = vpop.f32.mrf.mxu0
      %v871 = vadd.f32 0.0, %v870
      %v872 = vpop.f32.mrf.mxu0
      %873 = vmatprep.mubr.bf16.mxu0 0
      %874 = vmatmul.mubr.bf16.gmra.mxu0 %v681
      %v875 = vpop.f32.mrf.mxu0
      %v876 = vadd.f32 0.0, %v875
      %v877 = vpop.f32.mrf.mxu0
      %v878 = vpop.f32.mrf.mxu0
      %v879 = vadd.f32 0.0, %v878
      %v880 = vpop.f32.mrf.mxu0
      %881 = vmatprep.mubr.bf16.mxu0 0
      %882 = vmatmul.mubr.bf16.gmra.mxu0 %v684
      %v883 = vpop.f32.mrf.mxu0
      %v884 = vadd.f32 0.0, %v883
      %v885 = vpop.f32.mrf.mxu0
      %v886 = vpop.f32.mrf.mxu0
      %v887 = vadd.f32 0.0, %v886
      %v888 = vpop.f32.mrf.mxu0
      %889 = vmatprep.mubr.bf16.mxu0 0
      %890 = vmatmul.mubr.bf16.gmra.mxu0 %v687
      %v891 = vpop.f32.mrf.mxu0
      %v892 = vadd.f32 0.0, %v891
      %v893 = vpop.f32.mrf.mxu0
      %v894 = vpop.f32.mrf.mxu0
      %v895 = vadd.f32 0.0, %v894
      %v896 = vpop.f32.mrf.mxu0
      %897 = vmatprep.mubr.bf16.mxu0 0
      %898 = vmatmul.mubr.bf16.gmra.mxu0 %v690
      %v899 = vpop.f32.mrf.mxu0
      %v900 = vadd.f32 0.0, %v899
      %v901 = vpop.f32.mrf.mxu0
      %v902 = vpop.f32.mrf.mxu0
      %v903 = vadd.f32 0.0, %v902
      %v904 = vpop.f32.mrf.mxu0
      %905 = vmatprep.mubr.bf16.mxu0 0
      %906 = vmatmul.mubr.bf16.gmra.mxu0 %v693
      %v907 = vpop.f32.mrf.mxu0
      %v908 = vadd.f32 0.0, %v907
      %v909 = vpop.f32.mrf.mxu0
      %v910 = vpop.f32.mrf.mxu0
      %v911 = vadd.f32 0.0, %v910
      %v912 = vpop.f32.mrf.mxu0
      %913 = vmatprep.mubr.bf16.mxu0 0
      %914 = vmatmul.mubr.bf16.gmra.mxu0 %v696
      %v915 = vpop.f32.mrf.mxu0
      %v916 = vadd.f32 0.0, %v915
      %v917 = vpop.f32.mrf.mxu0
      %v918 = vpop.f32.mrf.mxu0
      %v919 = vadd.f32 0.0, %v918
      %v920 = vpop.f32.mrf.mxu0
      %921 = vmatprep.mubr.bf16.mxu0 0
      %922 = vmatmul.mubr.bf16.gmra.mxu0 %v699
      %v923 = vpop.f32.mrf.mxu0
      %v924 = vadd.f32 0.0, %v923
      %v925 = vpop.f32.mrf.mxu0
      %v926 = vpop.f32.mrf.mxu0
      %v927 = vadd.f32 0.0, %v926
      %v928 = vpop.f32.mrf.mxu0
      %929 = vmatprep.mubr.bf16.mxu0 0
      %930 = vmatmul.mubr.bf16.gmra.mxu0 %v702
      %v931 = vpop.f32.mrf.mxu0
      %v932 = vadd.f32 0.0, %v931
      %v933 = vpop.f32.mrf.mxu0
      %v934 = vpop.f32.mrf.mxu0
      %v935 = vadd.f32 0.0, %v934
      %v936 = vpop.f32.mrf.mxu0
      %937 = vmatprep.mubr.bf16.mxu0 0
      %938 = vmatmul.mubr.bf16.gmra.mxu0 %v705
      %v939 = vpop.f32.mrf.mxu0
      %v940 = vadd.f32 0.0, %v939
      %v941 = vpop.f32.mrf.mxu0
      %v942 = vpop.f32.mrf.mxu0
      %v943 = vadd.f32 0.0, %v942
      %v944 = vpop.f32.mrf.mxu0
      %945 = vmatprep.mubr.bf16.mxu0 0
      %946 = vmatmul.mubr.bf16.gmra.mxu0 %v708
      %v947 = vpop.f32.mrf.mxu0
      %v948 = vadd.f32 0.0, %v947
      %v949 = vpop.f32.mrf.mxu0
      %v950 = vpop.f32.mrf.mxu0
      %v951 = vadd.f32 0.0, %v950
      %v952 = vpop.f32.mrf.mxu0
      %953 = vmatprep.mubr.bf16.mxu0 0
      %954 = vmatmul.mubr.bf16.gmra.mxu0 %v711
      %v955 = vpop.f32.mrf.mxu0
      %v956 = vadd.f32 0.0, %v955
      %v957 = vpop.f32.mrf.mxu0
      %v958 = vpop.f32.mrf.mxu0
      %v959 = vadd.f32 0.0, %v958
      %v960 = vpop.f32.mrf.mxu0
      %961 = vmatprep.mubr.bf16.mxu0 0
      %962 = vmatmul.mubr.bf16.gmra.mxu0 %v714
      %v963 = vpop.f32.mrf.mxu0
      %v964 = vadd.f32 0.0, %v963
      %v965 = vpop.f32.mrf.mxu0
      %v966 = vpop.f32.mrf.mxu0
      %v967 = vadd.f32 0.0, %v966
      %v968 = vpop.f32.mrf.mxu0
      %969 = vmatprep.mubr.bf16.mxu0 0
      %970 = vmatmul.mubr.bf16.gmra.mxu0 %v717
      %v971 = vpop.f32.mrf.mxu0
      %v972 = vadd.f32 0.0, %v971
      %v973 = vpop.f32.mrf.mxu0
      %v974 = vpop.f32.mrf.mxu0
      %v975 = vadd.f32 0.0, %v974
      %v976 = vpop.f32.mrf.mxu0
      %977 = vmatprep.mubr.bf16.mxu0 0
      %978 = vmatmul.mubr.bf16.gmra.mxu0 %v720
      %v979 = vpop.f32.mrf.mxu0
      %v980 = vadd.f32 0.0, %v979
      %v981 = vpop.f32.mrf.mxu0
      %v982 = vpop.f32.mrf.mxu0
      %v983 = vadd.f32 0.0, %v982
      %v984 = vpop.f32.mrf.mxu0
      %985 = vmatprep.mubr.bf16.mxu0 0
      %986 = vmatmul.mubr.bf16.gmra.mxu0 %v723
      %v987 = vpop.f32.mrf.mxu0
      %v988 = vadd.f32 0.0, %v987
      %v989 = vpop.f32.mrf.mxu0
      %v990 = vpop.f32.mrf.mxu0
      %v991 = vadd.f32 0.0, %v990
      %v992 = vpop.f32.mrf.mxu0
      %993 = vmatprep.mubr.bf16.mxu0 0
      %994 = vmatmul.mubr.bf16.gmra.mxu0 %v726
      %v995 = vpop.f32.mrf.mxu0
      %v996 = vadd.f32 0.0, %v995
      %v997 = vpop.f32.mrf.mxu0
      %v998 = vpop.f32.mrf.mxu0
      %v999 = vadd.f32 0.0, %v998
      %v1000 = vpop.f32.mrf.mxu0
      %1001 = vmatprep.mubr.bf16.mxu0 0
      %1002 = vmatmul.mubr.bf16.gmra.mxu0 %v729
      %v1003 = vpop.f32.mrf.mxu0
      %v1004 = vadd.f32 0.0, %v1003
      %v1005 = vpop.f32.mrf.mxu0
      %v1006 = vpop.f32.mrf.mxu0
      %v1007 = vadd.f32 0.0, %v1006
      %v1008 = vpop.f32.mrf.mxu0
      %1009 = vmatprep.mubr.bf16.mxu0 0
      %1010 = vmatmul.mubr.bf16.gmra.mxu0 %v732
      %v1011 = vpop.f32.mrf.mxu0
      %v1012 = vadd.f32 0.0, %v1011
      %v1013 = vpop.f32.mrf.mxu0
      %v1014 = vpop.f32.mrf.mxu0
      %v1015 = vadd.f32 0.0, %v1014
      %v1016 = vpop.f32.mrf.mxu0
      %1017 = vmatprep.mubr.bf16.mxu0 0
      %1018 = vmatmul.mubr.bf16.gmra.mxu0 %v735
      %v1019 = vpop.f32.mrf.mxu0
      %v1020 = vadd.f32 0.0, %v1019
      %v1021 = vpop.f32.mrf.mxu0
      %v1022 = vpop.f32.mrf.mxu0
      %v1023 = vadd.f32 0.0, %v1022
      %v1024 = vpop.f32.mrf.mxu0
      %1025 = vdwg.mxu0
      %v1026 = vadd.f32 %v336, %v772
      %v1027 = vadd.f32 %v337, %v775
      %v1028 = vadd.f32 %v338, %v780
      %v1029 = vadd.f32 %v339, %v783
      %v1030 = vadd.f32 %v340, %v788
      %v1031 = vadd.f32 %v341, %v791
      %v1032 = vadd.f32 %v342, %v796
      %v1033 = vadd.f32 %v343, %v799
      %v1034 = vadd.f32 %v344, %v804
      %v1035 = vadd.f32 %v345, %v807
      %v1036 = vadd.f32 %v346, %v812
      %v1037 = vadd.f32 %v347, %v815
      %v1038 = vadd.f32 %v348, %v820
      %v1039 = vadd.f32 %v349, %v823
      %v1040 = vadd.f32 %v350, %v828
      %v1041 = vadd.f32 %v351, %v831
      %v1042 = vadd.f32 %v352, %v836
      %v1043 = vadd.f32 %v353, %v839
      %v1044 = vadd.f32 %v354, %v844
      %v1045 = vadd.f32 %v355, %v847
      %v1046 = vadd.f32 %v356, %v852
      %v1047 = vadd.f32 %v357, %v855
      %v1048 = vadd.f32 %v358, %v860
      %v1049 = vadd.f32 %v359, %v863
      %v1050 = vadd.f32 %v360, %v868
      %v1051 = vadd.f32 %v361, %v871
      %v1052 = vadd.f32 %v362, %v876
      %v1053 = vadd.f32 %v363, %v879
      %v1054 = vadd.f32 %v364, %v884
      %v1055 = vadd.f32 %v365, %v887
      %v1056 = vadd.f32 %v366, %v892
      %v1057 = vadd.f32 %v367, %v895
      %v1058 = vadd.f32 %v368, %v900
      %v1059 = vadd.f32 %v369, %v903
      %v1060 = vadd.f32 %v370, %v908
      %v1061 = vadd.f32 %v371, %v911
      %v1062 = vadd.f32 %v372, %v916
      %v1063 = vadd.f32 %v373, %v919
      %v1064 = vadd.f32 %v374, %v924
      %v1065 = vadd.f32 %v375, %v927
      %v1066 = vadd.f32 %v376, %v932
      %v1067 = vadd.f32 %v377, %v935
      %v1068 = vadd.f32 %v378, %v940
      %v1069 = vadd.f32 %v379, %v943
      %v1070 = vadd.f32 %v380, %v948
      %v1071 = vadd.f32 %v381, %v951
      %v1072 = vadd.f32 %v382, %v956
      %v1073 = vadd.f32 %v383, %v959
      %v1074 = vadd.f32 %v384, %v964
      %v1075 = vadd.f32 %v385, %v967
      %v1076 = vadd.f32 %v386, %v972
      %v1077 = vadd.f32 %v387, %v975
      %v1078 = vadd.f32 %v388, %v980
      %v1079 = vadd.f32 %v389, %v983
      %v1080 = vadd.f32 %v390, %v988
      %v1081 = vadd.f32 %v391, %v991
      %v1082 = vadd.f32 %v392, %v996
      %v1083 = vadd.f32 %v393, %v999
      %v1084 = vadd.f32 %v394, %v1004
      %v1085 = vadd.f32 %v395, %v1007
      %v1086 = vadd.f32 %v396, %v1012
      %v1087 = vadd.f32 %v397, %v1015
      %v1088 = vadd.f32 %v398, %v1020
      %v1089 = vadd.f32 %v399, %v1023
      %vm1090 = vcmask 523264
      %1091 = vst.msk [vmem:[#allocation2] sm:$0xff] %vm1090, %v1026
      %1092 = vst.msk [vmem:[#allocation2 + $0x8] sm:$0xff] %vm1090, %v1027
      %1093 = vst.msk [vmem:[#allocation2 + $0x10] sm:$0xff] %vm1090, %v1028
      %1094 = vst.msk [vmem:[#allocation2 + $0x18] sm:$0xff] %vm1090, %v1029
      %1095 = vst.msk [vmem:[#allocation2 + $0x20] sm:$0xff] %vm1090, %v1030
      %1096 = vst.msk [vmem:[#allocation2 + $0x28] sm:$0xff] %vm1090, %v1031
      %1097 = vst.msk [vmem:[#allocation2 + $0x30] sm:$0xff] %vm1090, %v1032
      %1098 = vst.msk [vmem:[#allocation2 + $0x38] sm:$0xff] %vm1090, %v1033
      %1099 = vst.msk [vmem:[#allocation2 + $0x40] sm:$0xff] %vm1090, %v1034
      %1100 = vst.msk [vmem:[#allocation2 + $0x48] sm:$0xff] %vm1090, %v1035
      %1101 = vst.msk [vmem:[#allocation2 + $0x50] sm:$0xff] %vm1090, %v1036
      %1102 = vst.msk [vmem:[#allocation2 + $0x58] sm:$0xff] %vm1090, %v1037
      %1103 = vst.msk [vmem:[#allocation2 + $0x60] sm:$0xff] %vm1090, %v1038
      %1104 = vst.msk [vmem:[#allocation2 + $0x68] sm:$0xff] %vm1090, %v1039
      %1105 = vst.msk [vmem:[#allocation2 + $0x70] sm:$0xff] %vm1090, %v1040
      %1106 = vst.msk [vmem:[#allocation2 + $0x78] sm:$0xff] %vm1090, %v1041
      %1107 = vst.msk [vmem:[#allocation2 + $0x80] sm:$0xff] %vm1090, %v1042
      %1108 = vst.msk [vmem:[#allocation2 + $0x88] sm:$0xff] %vm1090, %v1043
      %1109 = vst.msk [vmem:[#allocation2 + $0x90] sm:$0xff] %vm1090, %v1044
      %1110 = vst.msk [vmem:[#allocation2 + $0x98] sm:$0xff] %vm1090, %v1045
      %1111 = vst.msk [vmem:[#allocation2 + $0xa0] sm:$0xff] %vm1090, %v1046
      %1112 = vst.msk [vmem:[#allocation2 + $0xa8] sm:$0xff] %vm1090, %v1047
      %1113 = vst.msk [vmem:[#allocation2 + $0xb0] sm:$0xff] %vm1090, %v1048
      %1114 = vst.msk [vmem:[#allocation2 + $0xb8] sm:$0xff] %vm1090, %v1049
      %1115 = vst.msk [vmem:[#allocation2 + $0xc0] sm:$0xff] %vm1090, %v1050
      %1116 = vst.msk [vmem:[#allocation2 + $0xc8] sm:$0xff] %vm1090, %v1051
      %1117 = vst.msk [vmem:[#allocation2 + $0xd0] sm:$0xff] %vm1090, %v1052
      %1118 = vst.msk [vmem:[#allocation2 + $0xd8] sm:$0xff] %vm1090, %v1053
      %1119 = vst.msk [vmem:[#allocation2 + $0xe0] sm:$0xff] %vm1090, %v1054
      %1120 = vst.msk [vmem:[#allocation2 + $0xe8] sm:$0xff] %vm1090, %v1055
      %1121 = vst.msk [vmem:[#allocation2 + $0xf0] sm:$0xff] %vm1090, %v1056
      %1122 = vst.msk [vmem:[#allocation2 + $0xf8] sm:$0xff] %vm1090, %v1057
      %1123 = vst.msk [vmem:[#allocation2 + $0x100] sm:$0xff] %vm1090, %v1058
      %1124 = vst.msk [vmem:[#allocation2 + $0x108] sm:$0xff] %vm1090, %v1059
      %1125 = vst.msk [vmem:[#allocation2 + $0x110] sm:$0xff] %vm1090, %v1060
      %1126 = vst.msk [vmem:[#allocation2 + $0x118] sm:$0xff] %vm1090, %v1061
      %1127 = vst.msk [vmem:[#allocation2 + $0x120] sm:$0xff] %vm1090, %v1062
      %1128 = vst.msk [vmem:[#allocation2 + $0x128] sm:$0xff] %vm1090, %v1063
      %1129 = vst.msk [vmem:[#allocation2 + $0x130] sm:$0xff] %vm1090, %v1064
      %1130 = vst.msk [vmem:[#allocation2 + $0x138] sm:$0xff] %vm1090, %v1065
      %1131 = vst.msk [vmem:[#allocation2 + $0x140] sm:$0xff] %vm1090, %v1066
      %1132 = vst.msk [vmem:[#allocation2 + $0x148] sm:$0xff] %vm1090, %v1067
      %1133 = vst.msk [vmem:[#allocation2 + $0x150] sm:$0xff] %vm1090, %v1068
      %1134 = vst.msk [vmem:[#allocation2 + $0x158] sm:$0xff] %vm1090, %v1069
      %1135 = vst.msk [vmem:[#allocation2 + $0x160] sm:$0xff] %vm1090, %v1070
      %1136 = vst.msk [vmem:[#allocation2 + $0x168] sm:$0xff] %vm1090, %v1071
      %1137 = vst.msk [vmem:[#allocation2 + $0x170] sm:$0xff] %vm1090, %v1072
      %1138 = vst.msk [vmem:[#allocation2 + $0x178] sm:$0xff] %vm1090, %v1073
      %1139 = vst.msk [vmem:[#allocation2 + $0x180] sm:$0xff] %vm1090, %v1074
      %1140 = vst.msk [vmem:[#allocation2 + $0x188] sm:$0xff] %vm1090, %v1075
      %1141 = vst.msk [vmem:[#allocation2 + $0x190] sm:$0xff] %vm1090, %v1076
      %1142 = vst.msk [vmem:[#allocation2 + $0x198] sm:$0xff] %vm1090, %v1077
      %1143 = vst.msk [vmem:[#allocation2 + $0x1a0] sm:$0xff] %vm1090, %v1078
      %1144 = vst.msk [vmem:[#allocation2 + $0x1a8] sm:$0xff] %vm1090, %v1079
      %1145 = vst.msk [vmem:[#allocation2 + $0x1b0] sm:$0xff] %vm1090, %v1080
      %1146 = vst.msk [vmem:[#allocation2 + $0x1b8] sm:$0xff] %vm1090, %v1081
      %1147 = vst.msk [vmem:[#allocation2 + $0x1c0] sm:$0xff] %vm1090, %v1082
      %1148 = vst.msk [vmem:[#allocation2 + $0x1c8] sm:$0xff] %vm1090, %v1083
      %1149 = vst.msk [vmem:[#allocation2 + $0x1d0] sm:$0xff] %vm1090, %v1084
      %1150 = vst.msk [vmem:[#allocation2 + $0x1d8] sm:$0xff] %vm1090, %v1085
      %1151 = vst.msk [vmem:[#allocation2 + $0x1e0] sm:$0xff] %vm1090, %v1086
      %1152 = vst.msk [vmem:[#allocation2 + $0x1e8] sm:$0xff] %vm1090, %v1087
      %1153 = vst.msk [vmem:[#allocation2 + $0x1f0] sm:$0xff] %vm1090, %v1088
      %1154 = vst.msk [vmem:[#allocation2 + $0x1f8] sm:$0xff] %vm1090, %v1089
      // Predicated region
      $region37: #{tpu_custom_call.1} parent=31 // pred_check
        %p1155 = pneg %p260
      $region38: #{tpu_custom_call.1} parent=31 // pred_check_branch
        %1157 = sbr.rel (%p1155) target = $region40
      $region39: #{tpu_custom_call.1} parent=31 // pred_region
        %v1158 = vld [vmem:[#allocation2] sm:$0xff]
        %v1159 = vld [vmem:[#allocation2 + $0x8] sm:$0xff]
        %v1160 = vld [vmem:[#allocation2 + $0x10] sm:$0xff]
        %v1161 = vld [vmem:[#allocation2 + $0x18] sm:$0xff]
        %v1162 = vld [vmem:[#allocation2 + $0x20] sm:$0xff]
        %v1163 = vld [vmem:[#allocation2 + $0x28] sm:$0xff]
        %v1164 = vld [vmem:[#allocation2 + $0x30] sm:$0xff]
        %v1165 = vld [vmem:[#allocation2 + $0x38] sm:$0xff]
        %v1166 = vld [vmem:[#allocation2 + $0x40] sm:$0xff]
        %v1167 = vld [vmem:[#allocation2 + $0x48] sm:$0xff]
        %v1168 = vld [vmem:[#allocation2 + $0x50] sm:$0xff]
        %v1169 = vld [vmem:[#allocation2 + $0x58] sm:$0xff]
        %v1170 = vld [vmem:[#allocation2 + $0x60] sm:$0xff]
        %v1171 = vld [vmem:[#allocation2 + $0x68] sm:$0xff]
        %v1172 = vld [vmem:[#allocation2 + $0x70] sm:$0xff]
        %v1173 = vld [vmem:[#allocation2 + $0x78] sm:$0xff]
        %v1174 = vld [vmem:[#allocation2 + $0x80] sm:$0xff]
        %v1175 = vld [vmem:[#allocation2 + $0x88] sm:$0xff]
        %v1176 = vld [vmem:[#allocation2 + $0x90] sm:$0xff]
        %v1177 = vld [vmem:[#allocation2 + $0x98] sm:$0xff]
        %v1178 = vld [vmem:[#allocation2 + $0xa0] sm:$0xff]
        %v1179 = vld [vmem:[#allocation2 + $0xa8] sm:$0xff]
        %v1180 = vld [vmem:[#allocation2 + $0xb0] sm:$0xff]
        %v1181 = vld [vmem:[#allocation2 + $0xb8] sm:$0xff]
        %v1182 = vld [vmem:[#allocation2 + $0xc0] sm:$0xff]
        %v1183 = vld [vmem:[#allocation2 + $0xc8] sm:$0xff]
        %v1184 = vld [vmem:[#allocation2 + $0xd0] sm:$0xff]
        %v1185 = vld [vmem:[#allocation2 + $0xd8] sm:$0xff]
        %v1186 = vld [vmem:[#allocation2 + $0xe0] sm:$0xff]
        %v1187 = vld [vmem:[#allocation2 + $0xe8] sm:$0xff]
        %v1188 = vld [vmem:[#allocation2 + $0xf0] sm:$0xff]
        %v1189 = vld [vmem:[#allocation2 + $0xf8] sm:$0xff]
        %v1190 = vld [vmem:[#allocation2 + $0x100] sm:$0xff]
        %v1191 = vld [vmem:[#allocation2 + $0x108] sm:$0xff]
        %v1192 = vld [vmem:[#allocation2 + $0x110] sm:$0xff]
        %v1193 = vld [vmem:[#allocation2 + $0x118] sm:$0xff]
        %v1194 = vld [vmem:[#allocation2 + $0x120] sm:$0xff]
        %v1195 = vld [vmem:[#allocation2 + $0x128] sm:$0xff]
        %v1196 = vld [vmem:[#allocation2 + $0x130] sm:$0xff]
        %v1197 = vld [vmem:[#allocation2 + $0x138] sm:$0xff]
        %v1198 = vld [vmem:[#allocation2 + $0x140] sm:$0xff]
        %v1199 = vld [vmem:[#allocation2 + $0x148] sm:$0xff]
        %v1200 = vld [vmem:[#allocation2 + $0x150] sm:$0xff]
        %v1201 = vld [vmem:[#allocation2 + $0x158] sm:$0xff]
        %v1202 = vld [vmem:[#allocation2 + $0x160] sm:$0xff]
        %v1203 = vld [vmem:[#allocation2 + $0x168] sm:$0xff]
        %v1204 = vld [vmem:[#allocation2 + $0x170] sm:$0xff]
        %v1205 = vld [vmem:[#allocation2 + $0x178] sm:$0xff]
        %v1206 = vld [vmem:[#allocation2 + $0x180] sm:$0xff]
        %v1207 = vld [vmem:[#allocation2 + $0x188] sm:$0xff]
        %v1208 = vld [vmem:[#allocation2 + $0x190] sm:$0xff]
        %v1209 = vld [vmem:[#allocation2 + $0x198] sm:$0xff]
        %v1210 = vld [vmem:[#allocation2 + $0x1a0] sm:$0xff]
        %v1211 = vld [vmem:[#allocation2 + $0x1a8] sm:$0xff]
        %v1212 = vld [vmem:[#allocation2 + $0x1b0] sm:$0xff]
        %v1213 = vld [vmem:[#allocation2 + $0x1b8] sm:$0xff]
        %v1214 = vld [vmem:[#allocation2 + $0x1c0] sm:$0xff]
        %v1215 = vld [vmem:[#allocation2 + $0x1c8] sm:$0xff]
        %v1216 = vld [vmem:[#allocation2 + $0x1d0] sm:$0xff]
        %v1217 = vld [vmem:[#allocation2 + $0x1d8] sm:$0xff]
        %v1218 = vld [vmem:[#allocation2 + $0x1e0] sm:$0xff]
        %v1219 = vld [vmem:[#allocation2 + $0x1e8] sm:$0xff]
        %v1220 = vld [vmem:[#allocation2 + $0x1f0] sm:$0xff]
        %v1221 = vld [vmem:[#allocation2 + $0x1f8] sm:$0xff]
        %1222 = vst.msk [vmem:[%s257] sm:$0xff] %vm1090, %v1158
        %1223 = vst.msk [vmem:[%s257 + $0x8] sm:$0xff] %vm1090, %v1159
        %1224 = vst.msk [vmem:[%s257 + $0x10] sm:$0xff] %vm1090, %v1160
        %1225 = vst.msk [vmem:[%s257 + $0x18] sm:$0xff] %vm1090, %v1161
        %1226 = vst.msk [vmem:[%s257 + $0x20] sm:$0xff] %vm1090, %v1162
        %1227 = vst.msk [vmem:[%s257 + $0x28] sm:$0xff] %vm1090, %v1163
        %1228 = vst.msk [vmem:[%s257 + $0x30] sm:$0xff] %vm1090, %v1164
        %1229 = vst.msk [vmem:[%s257 + $0x38] sm:$0xff] %vm1090, %v1165
        %1230 = vst.msk [vmem:[%s257 + $0x40] sm:$0xff] %vm1090, %v1166
        %1231 = vst.msk [vmem:[%s257 + $0x48] sm:$0xff] %vm1090, %v1167
        %1232 = vst.msk [vmem:[%s257 + $0x50] sm:$0xff] %vm1090, %v1168
        %1233 = vst.msk [vmem:[%s257 + $0x58] sm:$0xff] %vm1090, %v1169
        %1234 = vst.msk [vmem:[%s257 + $0x60] sm:$0xff] %vm1090, %v1170
        %1235 = vst.msk [vmem:[%s257 + $0x68] sm:$0xff] %vm1090, %v1171
        %1236 = vst.msk [vmem:[%s257 + $0x70] sm:$0xff] %vm1090, %v1172
        %1237 = vst.msk [vmem:[%s257 + $0x78] sm:$0xff] %vm1090, %v1173
        %1238 = vst.msk [vmem:[%s257 + $0x80] sm:$0xff] %vm1090, %v1174
        %1239 = vst.msk [vmem:[%s257 + $0x88] sm:$0xff] %vm1090, %v1175
        %1240 = vst.msk [vmem:[%s257 + $0x90] sm:$0xff] %vm1090, %v1176
        %1241 = vst.msk [vmem:[%s257 + $0x98] sm:$0xff] %vm1090, %v1177
        %1242 = vst.msk [vmem:[%s257 + $0xa0] sm:$0xff] %vm1090, %v1178
        %1243 = vst.msk [vmem:[%s257 + $0xa8] sm:$0xff] %vm1090, %v1179
        %1244 = vst.msk [vmem:[%s257 + $0xb0] sm:$0xff] %vm1090, %v1180
        %1245 = vst.msk [vmem:[%s257 + $0xb8] sm:$0xff] %vm1090, %v1181
        %1246 = vst.msk [vmem:[%s257 + $0xc0] sm:$0xff] %vm1090, %v1182
        %1247 = vst.msk [vmem:[%s257 + $0xc8] sm:$0xff] %vm1090, %v1183
        %1248 = vst.msk [vmem:[%s257 + $0xd0] sm:$0xff] %vm1090, %v1184
        %1249 = vst.msk [vmem:[%s257 + $0xd8] sm:$0xff] %vm1090, %v1185
        %1250 = vst.msk [vmem:[%s257 + $0xe0] sm:$0xff] %vm1090, %v1186
        %1251 = vst.msk [vmem:[%s257 + $0xe8] sm:$0xff] %vm1090, %v1187
        %1252 = vst.msk [vmem:[%s257 + $0xf0] sm:$0xff] %vm1090, %v1188
        %1253 = vst.msk [vmem:[%s257 + $0xf8] sm:$0xff] %vm1090, %v1189
        %1254 = vst.msk [vmem:[%s257 + $0x100] sm:$0xff] %vm1090, %v1190
        %1255 = vst.msk [vmem:[%s257 + $0x108] sm:$0xff] %vm1090, %v1191
        %1256 = vst.msk [vmem:[%s257 + $0x110] sm:$0xff] %vm1090, %v1192
        %1257 = vst.msk [vmem:[%s257 + $0x118] sm:$0xff] %vm1090, %v1193
        %1258 = vst.msk [vmem:[%s257 + $0x120] sm:$0xff] %vm1090, %v1194
        %1259 = vst.msk [vmem:[%s257 + $0x128] sm:$0xff] %vm1090, %v1195
        %1260 = vst.msk [vmem:[%s257 + $0x130] sm:$0xff] %vm1090, %v1196
        %1261 = vst.msk [vmem:[%s257 + $0x138] sm:$0xff] %vm1090, %v1197
        %1262 = vst.msk [vmem:[%s257 + $0x140] sm:$0xff] %vm1090, %v1198
        %1263 = vst.msk [vmem:[%s257 + $0x148] sm:$0xff] %vm1090, %v1199
        %1264 = vst.msk [vmem:[%s257 + $0x150] sm:$0xff] %vm1090, %v1200
        %1265 = vst.msk [vmem:[%s257 + $0x158] sm:$0xff] %vm1090, %v1201
        %1266 = vst.msk [vmem:[%s257 + $0x160] sm:$0xff] %vm1090, %v1202
        %1267 = vst.msk [vmem:[%s257 + $0x168] sm:$0xff] %vm1090, %v1203
        %1268 = vst.msk [vmem:[%s257 + $0x170] sm:$0xff] %vm1090, %v1204
        %1269 = vst.msk [vmem:[%s257 + $0x178] sm:$0xff] %vm1090, %v1205
        %1270 = vst.msk [vmem:[%s257 + $0x180] sm:$0xff] %vm1090, %v1206
        %1271 = vst.msk [vmem:[%s257 + $0x188] sm:$0xff] %vm1090, %v1207
        %1272 = vst.msk [vmem:[%s257 + $0x190] sm:$0xff] %vm1090, %v1208
        %1273 = vst.msk [vmem:[%s257 + $0x198] sm:$0xff] %vm1090, %v1209
        %1274 = vst.msk [vmem:[%s257 + $0x1a0] sm:$0xff] %vm1090, %v1210
        %1275 = vst.msk [vmem:[%s257 + $0x1a8] sm:$0xff] %vm1090, %v1211
        %1276 = vst.msk [vmem:[%s257 + $0x1b0] sm:$0xff] %vm1090, %v1212
        %1277 = vst.msk [vmem:[%s257 + $0x1b8] sm:$0xff] %vm1090, %v1213
        %1278 = vst.msk [vmem:[%s257 + $0x1c0] sm:$0xff] %vm1090, %v1214
        %1279 = vst.msk [vmem:[%s257 + $0x1c8] sm:$0xff] %vm1090, %v1215
        %1280 = vst.msk [vmem:[%s257 + $0x1d0] sm:$0xff] %vm1090, %v1216
        %1281 = vst.msk [vmem:[%s257 + $0x1d8] sm:$0xff] %vm1090, %v1217
        %1282 = vst.msk [vmem:[%s257 + $0x1e0] sm:$0xff] %vm1090, %v1218
        %1283 = vst.msk [vmem:[%s257 + $0x1e8] sm:$0xff] %vm1090, %v1219
        %1284 = vst.msk [vmem:[%s257 + $0x1f0] sm:$0xff] %vm1090, %v1220
        %1285 = vst.msk [vmem:[%s257 + $0x1f8] sm:$0xff] %vm1090, %v1221
      $region40: #{tpu_custom_call.1} parent=31 // pred_fallthru
        _
      %s1286 = smul.u32 64, %s19
      %p1287 = scmp.lt.s32.totalorder %s1286, 127
      %s1288 = scalar_select %p1287, %s1286, 127
      %p1289 = scmp.lt.s32.totalorder %s20, 0
      %s1290 = scalar_select %p1289, %s20, 0
      %s1291 = sadd.s32 %s1290, %s1288
      %s1292 = smul.addr %s1291, 8
      %s1293 = scalar_lea.vmem %s3, %s1292
      // Predicated region
      $region41: #{tpu_custom_call.1} parent=31 // pred_check
        %p1294 = pneg %p135
      $region42: #{tpu_custom_call.1} parent=31 // pred_check_branch
        %1296 = sbr.rel (%p1294) target = $region44
      $region43: #{tpu_custom_call.1} parent=31 // pred_region
        %s1297 = smul.u32 64, %s19
      $region44: #{tpu_custom_call.1} parent=31 // pred_fallthru
        _
    $region32: #{tpu_custom_call.1} parent=5 // pred_fallthru
      _
    %p1298 = scmp.le.s32.totalorder 2, %s9
    // Predicated region
    $region45: #{tpu_custom_call.1} parent=5 // pred_check
      %p1299 = pneg %p1298
    $region46: #{tpu_custom_call.1} parent=5 // pred_check_branch
      %1301 = sbr.rel (%p1299) target = $region48
    $region47: #{tpu_custom_call.1} parent=5 // pred_region
      %s1302 = ssub.s32 %s9, 2
      // Predicated region
      $region49: #{tpu_custom_call.1} parent=47 // pred_check
        %p1303 = pneg %p141
      $region50: #{tpu_custom_call.1} parent=47 // pred_check_branch
        %1305 = sbr.rel (%p1303) target = $region52
      $region51: #{tpu_custom_call.1} parent=47 // pred_region
        %s1306 = smul.u32 64, %s22
        %p1307 = scmp.lt.s32.totalorder %s1306, 127
        %s1308 = scalar_select %p1307, %s1306, 127
        %p1309 = scmp.lt.s32.totalorder %s23, 0
        %s1310 = scalar_select %p1309, %s23, 0
        %s1311 = sadd.s32 %s1310, %s1308
        %s1312 = smul.addr %s1311, 8
        %s1313 = scalar_lea.vmem %s3, %s1312
      $region52: #{tpu_custom_call.1} parent=47 // pred_fallthru
        _
    $region48: #{tpu_custom_call.1} parent=5 // pred_fallthru
      _
  $region6: #{tpu_custom_call.1} parent=0 // loop_footer
    %s13 = sadd.s32 1, %s9
  $region7: #{tpu_custom_call.1} parent=0 // loop_footer_branch
    %8 = sbr.rel target = $region3
  $region8: #{tpu_custom_call.1} parent=0 // loop_exit
    _

</llo_original>
